<compile_context>
chip_gen: v5e
topology: v5e:2x2
jax: 0.10.0
libtpu: 0.0.40
codegen_flags: <defaults>
</compile_context>

<pallas_src>
import functools

import jax
import jax.numpy as jnp
from jax.experimental import pallas as pl
from jax.experimental.pallas import tpu as pltpu


LANE = 128                  # pad matmul N dims (mid, out) to this lane width
SUBLANE = 8                 # f32 sublane granularity for the batch (row) dim
_MEGACORE_MIN_ROWS = 256    # force >=2 batch tiles above this batch size (v7x)


def _round_up(n, m):
    return ((n + m - 1) // m) * m


@functools.lru_cache(maxsize=1)
def _vmem_budget_bytes():
    """Per-chip scoped-VMEM budget, with headroom for internal scratch/sems."""
    cap = None
    try:
        cap = getattr(pltpu.get_tpu_info(), "vmem_capacity_bytes", None)
    except Exception:
        cap = None
    if not cap:
        cap = 64 * 1024 * 1024              # conservative (v7x-sized) fallback
    budget = cap - 16 * 1024 * 1024         # never set the limit == physical
    return int(min(max(budget, 32 * 1024 * 1024), 112 * 1024 * 1024))


def decoder_kernel(x_ref, w1_ref, b1_ref, w2_ref, b2_ref, out_ref):
    # Cast the f32 x tile to the MXU dtype in-kernel (hides under the matmul).
    x = x_ref[...].astype(w1_ref.dtype)
    # fc1: x @ W1  (bf16 operands, f32 accumulation on the MXU)
    h = jnp.dot(x, w1_ref[...], preferred_element_type=jnp.float32)
    # bias + relu in f32 on the VPU (v5e has no bf16 VPU)
    h = jnp.maximum(h + b1_ref[...], 0.0)
    # fc2: relu(h) @ W2
    o = jnp.dot(h.astype(w2_ref.dtype), w2_ref[...],
                preferred_element_type=jnp.float32)
    out_ref[...] = (o + b2_ref[...]).astype(out_ref.dtype)


def prepare_params(w1, b1, w2, b2, compute_dtype=jnp.bfloat16):
    """One-time parameter prep (hoisted out of the forward pass).

    w1: [mid, hidden] (PyTorch layout), b1: [mid], w2: [out, mid], b2: [out].
    Returns pre-transposed bf16 weights with lane-padded N dims (mid, out) and
    f32 row biases.  The reduction dim `hidden` is left unpadded.
    """
    mid, hidden = w1.shape
    out = w2.shape[0]
    midp, outp = _round_up(mid, LANE), _round_up(out, LANE)
    w1_t = jnp.zeros((hidden, midp), compute_dtype).at[:, :mid].set(
        w1.T.astype(compute_dtype))
    b1_p = jnp.zeros((1, midp), jnp.float32).at[:, :mid].set(b1)
    w2_t = jnp.zeros((midp, outp), compute_dtype).at[:mid, :out].set(
        w2.T.astype(compute_dtype))
    b2_p = jnp.zeros((1, outp), jnp.float32).at[:, :out].set(b2)
    return w1_t, b1_p, w2_t, b2_p


def _vmem_bytes_needed(tm, hidden, midp, outp, x_itemsize, out_itemsize,
                       weight_buffers):
    """Rough VMEM budget: resident weights + pipelined x/out + temporaries."""
    weights = weight_buffers * ((hidden * midp + midp * outp) * 2   # bf16 W
                                + (midp + outp) * 4)                # f32 biases
    x_blk = 2 * tm * hidden * x_itemsize        # double-buffered marching input
    o_blk = 2 * tm * outp * out_itemsize        # double-buffered output
    # kernel-internal temporaries: bf16 x cast, f32 + bf16 h, f32 o
    tmp = tm * hidden * 2 + tm * midp * (4 + 2) + tm * outp * 4
    return weights + x_blk + o_blk + tmp


@functools.partial(
    jax.jit,
    static_argnames=("out_size", "block_m", "vmem_budget",
                     "single_buffer_weights"))
def _decoder_forward(x, w1_t, b1_p, w2_t, b2_p, *, out_size, block_m,
                     vmem_budget, single_buffer_weights):
    B, hidden = x.shape
    midp = w1_t.shape[1]
    outp = w2_t.shape[1]
    out_dtype = x.dtype
    x_itemsize = x.dtype.itemsize
    out_itemsize = jnp.zeros((), out_dtype).dtype.itemsize
    w_bufs = 1 if single_buffer_weights else 2

    # --- batch tile selection ------------------------------------------------
    # Balanced split (minimal padding) instead of rounding B up to block_m.
    grid_n = max(1, pl.cdiv(B, block_m))
    # v7x megacore: make sure large batches split across the 2 TensorCores.
    if grid_n == 1 and B >= _MEGACORE_MIN_ROWS:
        grid_n = 2
    tm = _round_up(pl.cdiv(B, grid_n), SUBLANE)
    # Shrink tm until the per-chip VMEM budget (including the f32 h temporary
    # and the single/double-buffered resident weights) is respected.
    while tm > SUBLANE and _vmem_bytes_needed(
            tm, hidden, midp, outp, x_itemsize, out_itemsize,
            w_bufs) > vmem_budget:
        tm = _round_up(max(tm // 2, SUBLANE), SUBLANE)
    grid_n = pl.cdiv(B, tm)

    resident = ({"pipeline_mode": pl.Buffered(1)}
                if single_buffer_weights else {})

    flops = 2 * B * (hidden * midp + midp * outp)
    bytes_accessed = (B * hidden * x_itemsize
                      + (hidden * midp + midp * outp) * 2
                      + (midp + outp) * 4
                      + B * outp * out_itemsize)

    out_padded = pl.pallas_call(
        decoder_kernel,
        out_shape=jax.ShapeDtypeStruct((B, outp), out_dtype),
        grid_spec=pltpu.PrefetchScalarGridSpec(
            num_scalar_prefetch=0,
            grid=(grid_n,),
            in_specs=[
                # x tile marches over batch rows; f32 straight from HBM, the
                # full-extent K dim needs no 128 padding.
                pl.BlockSpec((tm, hidden), lambda i: (i, 0)),
                # Grid-invariant weights/biases: resident (single-buffered).
                pl.BlockSpec((hidden, midp), lambda i: (0, 0), **resident),
                pl.BlockSpec((1, midp), lambda i: (0, 0), **resident),
                pl.BlockSpec((midp, outp), lambda i: (0, 0), **resident),
                pl.BlockSpec((1, outp), lambda i: (0, 0), **resident),
            ],
            out_specs=pl.BlockSpec((tm, outp), lambda i: (i, 0)),
        ),
        compiler_params=pltpu.CompilerParams(
            # Batch tiles are independent -> shard across TCs on v7x megacore.
            dimension_semantics=("parallel",),
            vmem_limit_bytes=vmem_budget,
        ),
        cost_estimate=pl.CostEstimate(
            flops=flops, transcendentals=0, bytes_accessed=bytes_accessed),
    )(x, w1_t, b1_p, w2_t, b2_p)

    # Output is already in x.dtype; only the lane padding needs slicing off.
    if outp == out_size:
        return out_padded
    return out_padded[:, :out_size]


def decoder_forward(x, w1_t, b1_p, w2_t, b2_p, *, out_size, block_m=1024):
    """x: [B, hidden] f32. Params from prepare_params(). Returns [B, out]."""
    kwargs = dict(out_size=out_size, block_m=block_m,
                  vmem_budget=_vmem_budget_bytes())
    try:
        return _decoder_forward(x, w1_t, b1_p, w2_t, b2_p,
                                single_buffer_weights=True, **kwargs)
    except Exception:
        # pipeline_mode=pl.Buffered(1) unsupported on this jax version ->
        # fall back to default (double-buffered) resident weights.
        return _decoder_forward(x, w1_t, b1_p, w2_t, b2_p,
                                single_buffer_weights=False, **kwargs)


def init_params(key, hidden_size, mid_size, output_size):
    """Deterministic xavier-normal weights, zero biases (as in init_weights)."""
    k1, k2 = jax.random.split(key)
    std1 = (2.0 / (hidden_size + mid_size)) ** 0.5
    std2 = (2.0 / (mid_size + output_size)) ** 0.5
    w1 = std1 * jax.random.normal(k1, (mid_size, hidden_size), jnp.float32)
    b1 = jnp.zeros((mid_size,), jnp.float32)
    w2 = std2 * jax.random.normal(k2, (output_size, mid_size), jnp.float32)
    b2 = jnp.zeros((output_size,), jnp.float32)
    return w1, b1, w2, b2


if __name__ == "__main__":
    key = jax.random.PRNGKey(0)
    kx, kp = jax.random.split(key)

    batch = 8
    hidden_size, mid_size, output_size = 32, 64, 16

    x = jax.random.normal(kx, (batch, hidden_size), jnp.float32)
    w1, b1, w2, b2 = init_params(kp, hidden_size, mid_size, output_size)

    # One-time param prep (transpose + lane-pad + bf16 cast), hoisted out of
    # the forward pass.
    w1_t, b1_p, w2_t, b2_p = prepare_params(w1, b1, w2, b2)

    out = decoder_forward(x, w1_t, b1_p, w2_t, b2_p, out_size=output_size)
    out = jax.block_until_ready(out)
    assert out.shape == (batch, output_size)
    assert out.dtype == x.dtype

    # Reference 1: same bf16-operand / f32-accumulation recipe in plain JAX.
    xb = x.astype(jnp.bfloat16)
    h_ref = jnp.maximum(
        jnp.dot(xb, w1.T.astype(jnp.bfloat16),
                preferred_element_type=jnp.float32) + b1, 0.0)
    ref_bf16 = jnp.dot(h_ref.astype(jnp.bfloat16), w2.T.astype(jnp.bfloat16),
                       preferred_element_type=jnp.float32) + b2
    assert jnp.allclose(out, ref_bf16, atol=2e-3, rtol=2e-3)

    # Reference 2: full-f32 reference with loose tolerance (bf16 matmul operands).
    ref_f32 = jnp.maximum(x @ w1.T + b1, 0.0) @ w2.T + b2
    assert jnp.allclose(out, ref_f32, atol=5e-2, rtol=5e-2)

    print("KERNEL_OK")
</pallas_src>

<mosaic_0001>
module attributes {stable_mosaic.version = 11 : i64} {
  func.func @decoder_kernel(%arg0: i32, %arg1: memref<8x32xf32, #tpu.memory_space<vmem>>, %arg2: memref<32x128xbf16, #tpu.memory_space<vmem>>, %arg3: memref<1x128xf32, #tpu.memory_space<vmem>>, %arg4: memref<128x128xbf16, #tpu.memory_space<vmem>>, %arg5: memref<1x128xf32, #tpu.memory_space<vmem>>, %arg6: memref<8x128xf32, #tpu.memory_space<vmem>>) attributes {dimension_semantics = [#tpu.dimension_semantics<parallel>], iteration_bounds = array<i64: 1>, scalar_prefetch = 0 : i64, scratch_operands = 0 : i64, tpu.core_type = #tpu.core_type<tc>, window_params = [{transform_indices = @transform_0, window_bounds = array<i64: 8, 32>}, {pipeline_mode = #tpu.pipeline_mode<synchronous>, transform_indices = @transform_1, window_bounds = array<i64: 32, 128>}, {pipeline_mode = #tpu.pipeline_mode<synchronous>, transform_indices = @transform_2, window_bounds = array<i64: 1, 128>}, {pipeline_mode = #tpu.pipeline_mode<synchronous>, transform_indices = @transform_3, window_bounds = array<i64: 128, 128>}, {pipeline_mode = #tpu.pipeline_mode<synchronous>, transform_indices = @transform_4, window_bounds = array<i64: 1, 128>}, {transform_indices = @transform_5, window_bounds = array<i64: 8, 128>}]} {
    %c0 = arith.constant 0 : index
    %c0_0 = arith.constant 0 : index
    %0 = vector.load %arg1[%c0, %c0_0] : memref<8x32xf32, #tpu.memory_space<vmem>>, vector<8x32xf32>
    %1 = arith.truncf %0 : vector<8x32xf32> to vector<8x32xbf16>
    %c0_1 = arith.constant 0 : index
    %c0_2 = arith.constant 0 : index
    %2 = vector.load %arg2[%c0_1, %c0_2] : memref<32x128xbf16, #tpu.memory_space<vmem>>, vector<32x128xbf16>
    %cst = arith.constant dense<0.000000e+00> : vector<8x128xf32>
    %3 = tpu.matmul %1, %2, %cst {dimension_numbers = #tpu.dot_dimension_numbers<[1], [0], [0], [1], [0, 0, 1, 1], [], []>} : vector<8x32xbf16>, vector<32x128xbf16>, vector<8x128xf32> -> vector<8x128xf32>
    %c0_3 = arith.constant 0 : index
    %c0_4 = arith.constant 0 : index
    %4 = vector.load %arg3[%c0_3, %c0_4] : memref<1x128xf32, #tpu.memory_space<vmem>>, vector<1x128xf32>
    %5 = vector.broadcast %4 : vector<1x128xf32> to vector<8x128xf32>
    %6 = arith.addf %3, %5 : vector<8x128xf32>
    %cst_5 = arith.constant 0.000000e+00 : f32
    %7 = vector.broadcast %cst_5 : f32 to vector<8x128xf32>
    %8 = arith.maximumf %6, %7 : vector<8x128xf32>
    %9 = arith.truncf %8 : vector<8x128xf32> to vector<8x128xbf16>
    %c0_6 = arith.constant 0 : index
    %c0_7 = arith.constant 0 : index
    %10 = vector.load %arg4[%c0_6, %c0_7] : memref<128x128xbf16, #tpu.memory_space<vmem>>, vector<128x128xbf16>
    %cst_8 = arith.constant dense<0.000000e+00> : vector<8x128xf32>
    %11 = tpu.matmul %9, %10, %cst_8 {dimension_numbers = #tpu.dot_dimension_numbers<[1], [0], [0], [1], [0, 0, 1, 1], [], []>} : vector<8x128xbf16>, vector<128x128xbf16>, vector<8x128xf32> -> vector<8x128xf32>
    %c0_9 = arith.constant 0 : index
    %c0_10 = arith.constant 0 : index
    %12 = vector.load %arg5[%c0_9, %c0_10] : memref<1x128xf32, #tpu.memory_space<vmem>>, vector<1x128xf32>
    %13 = vector.broadcast %12 : vector<1x128xf32> to vector<8x128xf32>
    %14 = arith.addf %11, %13 : vector<8x128xf32>
    %c0_11 = arith.constant 0 : index
    %c0_12 = arith.constant 0 : index
    %15 = vector.load %arg6[%c0_11, %c0_12] : memref<8x128xf32, #tpu.memory_space<vmem>>, vector<8x128xf32>
    tpu.vector_store %arg6[%c0_11, %c0_12], %14 {strides = array<i32>} : memref<8x128xf32, #tpu.memory_space<vmem>>, vector<8x128xf32>,
    return
  }
  func.func @transform_0(%arg0: i32) -> (i32, i32) {
    %c0_i32 = arith.constant 0 : i32
    %c0_i32_0 = arith.constant 0 : i32
    return %arg0, %c0_i32 : i32, i32
  }
  func.func @transform_1(%arg0: i32) -> (i32, i32) {
    %c0_i32 = arith.constant 0 : i32
    %c0_i32_0 = arith.constant 0 : i32
    %c0_i32_1 = arith.constant 0 : i32
    return %c0_i32, %c0_i32_0 : i32, i32
  }
  func.func @transform_2(%arg0: i32) -> (i32, i32) {
    %c0_i32 = arith.constant 0 : i32
    %c0_i32_0 = arith.constant 0 : i32
    %c0_i32_1 = arith.constant 0 : i32
    return %c0_i32, %c0_i32_0 : i32, i32
  }
  func.func @transform_3(%arg0: i32) -> (i32, i32) {
    %c0_i32 = arith.constant 0 : i32
    %c0_i32_0 = arith.constant 0 : i32
    %c0_i32_1 = arith.constant 0 : i32
    return %c0_i32, %c0_i32_0 : i32, i32
  }
  func.func @transform_4(%arg0: i32) -> (i32, i32) {
    %c0_i32 = arith.constant 0 : i32
    %c0_i32_0 = arith.constant 0 : i32
    %c0_i32_1 = arith.constant 0 : i32
    return %c0_i32, %c0_i32_0 : i32, i32
  }
  func.func @transform_5(%arg0: i32) -> (i32, i32) {
    %c0_i32 = arith.constant 0 : i32
    %c0_i32_0 = arith.constant 0 : i32
    return %arg0, %c0_i32 : i32, i32
  }
}

module attributes {stable_mosaic.version = 11 : i64} {
  func.func @decoder_kernel(%arg0: i32, %arg1: memref<8x32xf32, #tpu.memory_space<vmem>>, %arg2: memref<32x128xbf16, #tpu.memory_space<vmem>>, %arg3: memref<1x128xf32, #tpu.memory_space<vmem>>, %arg4: memref<128x128xbf16, #tpu.memory_space<vmem>>, %arg5: memref<1x128xf32, #tpu.memory_space<vmem>>, %arg6: memref<8x128xf32, #tpu.memory_space<vmem>>) attributes {dimension_semantics = [#tpu.dimension_semantics<parallel>], iteration_bounds = array<i64: 1>, scalar_prefetch = 0 : i64, scratch_operands = 0 : i64, tpu.core_type = #tpu.core_type<tc>, window_params = [{transform_indices = @transform_0, window_bounds = array<i64: 8, 32>}, {pipeline_mode = #tpu.pipeline_mode<synchronous>, transform_indices = @transform_1, window_bounds = array<i64: 32, 128>}, {pipeline_mode = #tpu.pipeline_mode<synchronous>, transform_indices = @transform_2, window_bounds = array<i64: 1, 128>}, {pipeline_mode = #tpu.pipeline_mode<synchronous>, transform_indices = @transform_3, window_bounds = array<i64: 128, 128>}, {pipeline_mode = #tpu.pipeline_mode<synchronous>, transform_indices = @transform_4, window_bounds = array<i64: 1, 128>}, {transform_indices = @transform_5, window_bounds = array<i64: 8, 128>}]} {
    %c0 = arith.constant 0 : index
    %c0_0 = arith.constant 0 : index
    %0 = vector.load %arg1[%c0, %c0_0] : memref<8x32xf32, #tpu.memory_space<vmem>>, vector<8x32xf32>
    %1 = arith.truncf %0 : vector<8x32xf32> to vector<8x32xbf16>
    %c0_1 = arith.constant 0 : index
    %c0_2 = arith.constant 0 : index
    %2 = vector.load %arg2[%c0_1, %c0_2] : memref<32x128xbf16, #tpu.memory_space<vmem>>, vector<32x128xbf16>
    %cst = arith.constant dense<0.000000e+00> : vector<8x128xf32>
    %3 = tpu.matmul %1, %2, %cst {dimension_numbers = #tpu.dot_dimension_numbers<[1], [0], [0], [1], [0, 0, 1, 1], [], []>} : vector<8x32xbf16>, vector<32x128xbf16>, vector<8x128xf32> -> vector<8x128xf32>
    %c0_3 = arith.constant 0 : index
    %c0_4 = arith.constant 0 : index
    %4 = vector.load %arg3[%c0_3, %c0_4] : memref<1x128xf32, #tpu.memory_space<vmem>>, vector<1x128xf32>
    %5 = vector.broadcast %4 : vector<1x128xf32> to vector<8x128xf32>
    %6 = arith.addf %3, %5 : vector<8x128xf32>
    %cst_5 = arith.constant 0.000000e+00 : f32
    %7 = vector.broadcast %cst_5 : f32 to vector<8x128xf32>
    %8 = arith.maximumf %6, %7 : vector<8x128xf32>
    %9 = arith.truncf %8 : vector<8x128xf32> to vector<8x128xbf16>
    %c0_6 = arith.constant 0 : index
    %c0_7 = arith.constant 0 : index
    %10 = vector.load %arg4[%c0_6, %c0_7] : memref<128x128xbf16, #tpu.memory_space<vmem>>, vector<128x128xbf16>
    %cst_8 = arith.constant dense<0.000000e+00> : vector<8x128xf32>
    %11 = tpu.matmul %9, %10, %cst_8 {dimension_numbers = #tpu.dot_dimension_numbers<[1], [0], [0], [1], [0, 0, 1, 1], [], []>} : vector<8x128xbf16>, vector<128x128xbf16>, vector<8x128xf32> -> vector<8x128xf32>
    %c0_9 = arith.constant 0 : index
    %c0_10 = arith.constant 0 : index
    %12 = vector.load %arg5[%c0_9, %c0_10] : memref<1x128xf32, #tpu.memory_space<vmem>>, vector<1x128xf32>
    %13 = vector.broadcast %12 : vector<1x128xf32> to vector<8x128xf32>
    %14 = arith.addf %11, %13 : vector<8x128xf32>
    %c0_11 = arith.constant 0 : index
    %c0_12 = arith.constant 0 : index
    %15 = vector.load %arg6[%c0_11, %c0_12] : memref<8x128xf32, #tpu.memory_space<vmem>>, vector<8x128xf32>
    tpu.vector_store %arg6[%c0_11, %c0_12], %14 {strides = array<i32>} : memref<8x128xf32, #tpu.memory_space<vmem>>, vector<8x128xf32>,
    return
  }
  func.func @transform_0(%arg0: i32) -> (i32, i32) {
    %c0_i32 = arith.constant 0 : i32
    %c0_i32_0 = arith.constant 0 : i32
    return %arg0, %c0_i32 : i32, i32
  }
  func.func @transform_1(%arg0: i32) -> (i32, i32) {
    %c0_i32 = arith.constant 0 : i32
    %c0_i32_0 = arith.constant 0 : i32
    %c0_i32_1 = arith.constant 0 : i32
    return %c0_i32, %c0_i32_0 : i32, i32
  }
  func.func @transform_2(%arg0: i32) -> (i32, i32) {
    %c0_i32 = arith.constant 0 : i32
    %c0_i32_0 = arith.constant 0 : i32
    %c0_i32_1 = arith.constant 0 : i32
    return %c0_i32, %c0_i32_0 : i32, i32
  }
  func.func @transform_3(%arg0: i32) -> (i32, i32) {
    %c0_i32 = arith.constant 0 : i32
    %c0_i32_0 = arith.constant 0 : i32
    %c0_i32_1 = arith.constant 0 : i32
    return %c0_i32, %c0_i32_0 : i32, i32
  }
  func.func @transform_4(%arg0: i32) -> (i32, i32) {
    %c0_i32 = arith.constant 0 : i32
    %c0_i32_0 = arith.constant 0 : i32
    %c0_i32_1 = arith.constant 0 : i32
    return %c0_i32, %c0_i32_0 : i32, i32
  }
  func.func @transform_5(%arg0: i32) -> (i32, i32) {
    %c0_i32 = arith.constant 0 : i32
    %c0_i32_0 = arith.constant 0 : i32
    return %arg0, %c0_i32 : i32, i32
  }
}

</mosaic_0001>

<llo_original>
// kernel: _decoder_forward.1
$region0: #{_decoder_forward.1}
  #allocation0 [shape = 'u32[]', space=smem, size = 0x4, offset = 0x4, fixed_abs, tag = 'smem constant byte address 0x4 - core index']
  #allocation1 [shape = 'u32[72,128]{1,0:T(1,128)}', space=vmem, size = 0x9000, scoped, tag = 'internal scratch']
  %s0 = inlined_call_operand.hbm [shape: f32[8,32], index: 0, kind: input, shape index: {}]
  %s1 = inlined_call_operand.hbm [shape: bf16[32,128], index: 1, kind: input, shape index: {}]
  %s2 = inlined_call_operand.vmem [shape: f32[1,128], index: 2, kind: input, shape index: {}]
  %s3 = inlined_call_operand.hbm [shape: bf16[128,128], index: 3, kind: input, shape index: {}]
  %s4 = inlined_call_operand.vmem [shape: f32[1,128], index: 4, kind: input, shape index: {}]
  %s5 = inlined_call_operand.hbm [shape: f32[8,128], index: 5, kind: output, shape index: {}]
  %s6 = sld [smem:[#allocation0]]
  $region42: #{_decoder_forward.1} parent=0
    _
  %s8 = ssub.s32 1, %s6
  %s9 = scalar_select 0, %s8, %s6
  $region1: #{_decoder_forward.1} parent=0
    #allocation2 [shape = 'u8[4096]{0}', space=vmem, size = 0x1000, scoped, tag = 'input window, operand 0, single buffered']
    #allocation3 [shape = 's32[1]{0}', space=sflag, size = 0x4, scoped, tag = 'scoped memory for _decoder_forward.1']
    #allocation4 [shape = 's32[1]{0}', space=sflag, size = 0x4, scoped, tag = 'scoped memory for _decoder_forward.1']
    #allocation5 [shape = 'u8[8192]{0}', space=vmem, size = 0x2000, scoped, tag = 'input window, operand 1, single buffered']
    #allocation6 [shape = 's32[1]{0}', space=sflag, size = 0x4, scoped, tag = 'scoped memory for _decoder_forward.1']
    #allocation7 [shape = 'u8[32768]{0}', space=vmem, size = 0x8000, scoped, tag = 'input window, operand 3, single buffered']
    #allocation8 [shape = 'u8[4096]{0}', space=vmem, size = 0x1000, scoped, tag = 'output window, operand 0, single buffered']
    %10 = vsyncpa [#allocation3], 0
    %11 = vsyncpa [#allocation6], 0
    %12 = vsyncpa [#allocation4], 0
    // Predicated region
    $region2: #{_decoder_forward.1} parent=1 // pred_check
      _
    $region3: #{_decoder_forward.1} parent=1 // pred_check_branch
      %14 = sbr.rel (0) target = $region5
    $region4: #{_decoder_forward.1} parent=1 // pred_region
      %16 = vsyncadd [#allocation3], 0
      %s18 = sshll.u32 %s0, 4
      %s19 = int_to_ptr.hbm [resolvable:$true] %s18
      %s20 = sshll.u32 [#allocation2], 4
      %s21 = int_to_ptr.vmem [resolvable:$true] %s20
      %23 = dma.hbm_to_vmem [thread:$0]  %s19, 128, %s21, [#allocation3]
    $region5: #{_decoder_forward.1} parent=1 // pred_fallthru
      _
    // Predicated region
    $region6: #{_decoder_forward.1} parent=1 // pred_check
      _
    $region7: #{_decoder_forward.1} parent=1 // pred_check_branch
      %25 = sbr.rel (0) target = $region9
    $region8: #{_decoder_forward.1} parent=1 // pred_region
      %27 = vsyncadd [#allocation6], 0
      %s28 = sshll.u32 %s1, 4
      %s29 = int_to_ptr.hbm [resolvable:$true] %s28
      %s30 = sshll.u32 [#allocation5], 4
      %s31 = int_to_ptr.vmem [resolvable:$true] %s30
      %36 = dma.hbm_to_vmem [thread:$0]  %s29, 256, %s31, [#allocation6], 64, 64, 4
    $region9: #{_decoder_forward.1} parent=1 // pred_fallthru
      _
    // Predicated region
    $region10: #{_decoder_forward.1} parent=1 // pred_check
      _
    $region11: #{_decoder_forward.1} parent=1 // pred_check_branch
      %38 = sbr.rel (0) target = $region13
    $region12: #{_decoder_forward.1} parent=1 // pred_region
      _
    $region13: #{_decoder_forward.1} parent=1 // pred_fallthru
      _
    // Predicated region
    $region14: #{_decoder_forward.1} parent=1 // pred_check
      _
    $region15: #{_decoder_forward.1} parent=1 // pred_check_branch
      %40 = sbr.rel (0) target = $region17
    $region16: #{_decoder_forward.1} parent=1 // pred_region
      %42 = vsyncadd [#allocation6], 0
      %s43 = sshll.u32 %s3, 4
      %s44 = int_to_ptr.hbm [resolvable:$true] %s43
      %s45 = sshll.u32 [#allocation7], 4
      %s46 = int_to_ptr.vmem [resolvable:$true] %s45
      %51 = dma.hbm_to_vmem [thread:$0]  %s44, 1024, %s46, [#allocation6], 64, 64, 4
    $region17: #{_decoder_forward.1} parent=1 // pred_fallthru
      _
    // Predicated region
    $region18: #{_decoder_forward.1} parent=1 // pred_check
      _
    $region19: #{_decoder_forward.1} parent=1 // pred_check_branch
      %53 = sbr.rel (0) target = $region21
    $region20: #{_decoder_forward.1} parent=1 // pred_region
      _
    $region21: #{_decoder_forward.1} parent=1 // pred_fallthru
      _
    // Predicated region
    $region22: #{_decoder_forward.1} parent=1 // pred_check
      _
    $region23: #{_decoder_forward.1} parent=1 // pred_check_branch
      %55 = sbr.rel (0) target = $region25
    $region24: #{_decoder_forward.1} parent=1 // pred_region
      %57 = dma.done [#allocation3], 128
    $region25: #{_decoder_forward.1} parent=1 // pred_fallthru
      _
    // Predicated region
    $region26: #{_decoder_forward.1} parent=1 // pred_check
      _
    $region27: #{_decoder_forward.1} parent=1 // pred_check_branch
      %59 = sbr.rel (0) target = $region29
    $region28: #{_decoder_forward.1} parent=1 // pred_region
      %61 = dma.done [#allocation6], 256
    $region29: #{_decoder_forward.1} parent=1 // pred_fallthru
      _
    // Predicated region
    $region30: #{_decoder_forward.1} parent=1 // pred_check
      _
    $region31: #{_decoder_forward.1} parent=1 // pred_check_branch
      %63 = sbr.rel (0) target = $region33
    $region32: #{_decoder_forward.1} parent=1 // pred_region
      %65 = dma.done [#allocation6], 1024
    $region33: #{_decoder_forward.1} parent=1 // pred_fallthru
      _
    %v67 = vld [vmem:[#allocation2] sm:$0xff]
    %v68 = vpack.c.bf16 %v67, %v67
    %v69 = vld [vmem:[#allocation5] sm:$0xf]
    %v70 = vld [vmem:[#allocation5 + $0x4] sm:$0xf]
    %v71 = vld [vmem:[#allocation5 + $0x8] sm:$0xf]
    %v72 = vld [vmem:[#allocation5 + $0xc] sm:$0xf]
    %v73 = vld [vmem:[%s2] sm:$0x1]
    %v75 = vperm.slane %v73, 0
    %v81 = vunpack.c.l.b16 %v69
    %v82 = vunpack.c.l.b16 %v70
    %v83 = vunpack.c.l.b16 %v71
    %v84 = vunpack.c.l.b16 %v72
    %v85 = vpack.c.b16 %v82, %v81
    %v86 = vpack.c.b16 %v84, %v83
    %vm89 = vcmask 261120
    %v91 = vsel %vm89, %v68, 0
    %93 = vmatpush.bf16.msra.mxu0 0
    %94 = vmatpush.bf16.msra.mxu0 0
    %95 = vmatpush.bf16.msra.mxu0 0
    %96 = vmatpush.bf16.msra.mxu0 0
    %97 = vmatpush.bf16.msra.mxu0 0
    %98 = vmatpush.bf16.msra.mxu0 0
    %99 = vmatpush.bf16.msra.mxu0 %v86
    %100 = vmatpush.bf16.msra.mxu0 %v85
    %101 = vmatmul.bf16.gmra.mxu0 %v91
    %v102 = vpop.f32.mrf.mxu0
    %v103 = vadd.f32 %v75, %v102
    %v104 = vpop.f32.mrf.mxu0
    %105 = vdwg.mxu0
    %v106 = vmax.f32 %v103, 0.0
    %v107 = vpack.c.bf16 %v106, %v106
    %v108 = vld [vmem:[#allocation7] sm:$0xf]
    %v109 = vld [vmem:[#allocation7 + $0x4] sm:$0xf]
    %v110 = vld [vmem:[#allocation7 + $0x8] sm:$0xf]
    %v111 = vld [vmem:[#allocation7 + $0xc] sm:$0xf]
    %v112 = vld [vmem:[#allocation7 + $0x10] sm:$0xf]
    %v113 = vld [vmem:[#allocation7 + $0x14] sm:$0xf]
    %v114 = vld [vmem:[#allocation7 + $0x18] sm:$0xf]
    %v115 = vld [vmem:[#allocation7 + $0x1c] sm:$0xf]
    %v116 = vld [vmem:[#allocation7 + $0x20] sm:$0xf]
    %v117 = vld [vmem:[#allocation7 + $0x24] sm:$0xf]
    %v118 = vld [vmem:[#allocation7 + $0x28] sm:$0xf]
    %v119 = vld [vmem:[#allocation7 + $0x2c] sm:$0xf]
    %v120 = vld [vmem:[#allocation7 + $0x30] sm:$0xf]
    %v121 = vld [vmem:[#allocation7 + $0x34] sm:$0xf]
    %v122 = vld [vmem:[#allocation7 + $0x38] sm:$0xf]
    %v123 = vld [vmem:[#allocation7 + $0x3c] sm:$0xf]
    %v124 = vld [vmem:[%s4] sm:$0x1]
    %v126 = vperm.slane %v124, 0
    %v144 = vunpack.c.l.b16 %v108
    %v145 = vunpack.c.l.b16 %v109
    %v146 = vunpack.c.l.b16 %v110
    %v147 = vunpack.c.l.b16 %v111
    %v148 = vunpack.c.l.b16 %v112
    %v149 = vunpack.c.l.b16 %v113
    %v150 = vunpack.c.l.b16 %v114
    %v151 = vunpack.c.l.b16 %v115
    %v152 = vunpack.c.l.b16 %v116
    %v153 = vunpack.c.l.b16 %v117
    %v154 = vunpack.c.l.b16 %v118
    %v155 = vunpack.c.l.b16 %v119
    %v156 = vunpack.c.l.b16 %v120
    %v157 = vunpack.c.l.b16 %v121
    %v158 = vunpack.c.l.b16 %v122
    %v159 = vunpack.c.l.b16 %v123
    %v160 = vpack.c.b16 %v145, %v144
    %v161 = vpack.c.b16 %v147, %v146
    %v162 = vpack.c.b16 %v149, %v148
    %v163 = vpack.c.b16 %v151, %v150
    %v164 = vpack.c.b16 %v153, %v152
    %v165 = vpack.c.b16 %v155, %v154
    %v166 = vpack.c.b16 %v157, %v156
    %v167 = vpack.c.b16 %v159, %v158
    %176 = vmatpush.bf16.msra.mxu0 %v167
    %177 = vmatpush.bf16.msra.mxu0 %v166
    %178 = vmatpush.bf16.msra.mxu0 %v165
    %179 = vmatpush.bf16.msra.mxu0 %v164
    %180 = vmatpush.bf16.msra.mxu0 %v163
    %181 = vmatpush.bf16.msra.mxu0 %v162
    %182 = vmatpush.bf16.msra.mxu0 %v161
    %183 = vmatpush.bf16.msra.mxu0 %v160
    %184 = vmatmul.bf16.gmra.mxu0 %v107
    %v185 = vpop.f32.mrf.mxu0
    %v186 = vadd.f32 %v126, %v185
    %v187 = vpop.f32.mrf.mxu0
    %188 = vdwg.mxu0
    %189 = vst [vmem:[#allocation8] sm:$0xff] %v186
    // Predicated region
    $region34: #{_decoder_forward.1} parent=1 // pred_check
      _
    $region35: #{_decoder_forward.1} parent=1 // pred_check_branch
      %191 = sbr.rel (0) target = $region37
    $region36: #{_decoder_forward.1} parent=1 // pred_region
      %193 = vsyncadd [#allocation4], 0
      %s195 = sshll.u32 [#allocation8], 4
      %s196 = int_to_ptr.vmem [resolvable:$true] %s195
      %s197 = sshll.u32 %s5, 4
      %s198 = int_to_ptr.hbm [resolvable:$true] %s197
      %200 = dma.vmem_to_hbm [thread:$0]  %s196, 128, %s198, [#allocation4]
    $region37: #{_decoder_forward.1} parent=1 // pred_fallthru
      _
    // Predicated region
    $region38: #{_decoder_forward.1} parent=1 // pred_check
      _
    $region39: #{_decoder_forward.1} parent=1 // pred_check_branch
      %202 = sbr.rel (0) target = $region41
    $region40: #{_decoder_forward.1} parent=1 // pred_region
      %204 = dma.done [#allocation4], 128
    $region41: #{_decoder_forward.1} parent=1 // pred_fallthru
      _
    %205 = vsyncpa [#allocation3], 1
    %206 = vsyncpa [#allocation6], 1
    %207 = vsyncpa [#allocation4], 1

// kernel: _decoder_forward.1
$region0: #{_decoder_forward.1}
  #allocation0 [shape = 'u32[]', space=smem, size = 0x4, offset = 0x4, fixed_abs, tag = 'smem constant byte address 0x4 - core index']
  #allocation1 [shape = 'u32[72,128]{1,0:T(1,128)}', space=vmem, size = 0x9000, scoped, tag = 'internal scratch']
  %s0 = inlined_call_operand.hbm [shape: f32[8,32], index: 0, kind: input, shape index: {}]
  %s1 = inlined_call_operand.hbm [shape: bf16[32,128], index: 1, kind: input, shape index: {}]
  %s2 = inlined_call_operand.vmem [shape: f32[1,128], index: 2, kind: input, shape index: {}]
  %s3 = inlined_call_operand.hbm [shape: bf16[128,128], index: 3, kind: input, shape index: {}]
  %s4 = inlined_call_operand.vmem [shape: f32[1,128], index: 4, kind: input, shape index: {}]
  %s5 = inlined_call_operand.hbm [shape: f32[8,128], index: 5, kind: output, shape index: {}]
  %s6 = sld [smem:[#allocation0]]
  $region42: #{_decoder_forward.1} parent=0
    _
  %s8 = ssub.s32 1, %s6
  %s9 = scalar_select 0, %s8, %s6
  $region1: #{_decoder_forward.1} parent=0
    #allocation2 [shape = 'u8[4096]{0}', space=vmem, size = 0x1000, scoped, tag = 'input window, operand 0, single buffered']
    #allocation3 [shape = 's32[1]{0}', space=sflag, size = 0x4, scoped, tag = 'scoped memory for _decoder_forward.1']
    #allocation4 [shape = 's32[1]{0}', space=sflag, size = 0x4, scoped, tag = 'scoped memory for _decoder_forward.1']
    #allocation5 [shape = 'u8[8192]{0}', space=vmem, size = 0x2000, scoped, tag = 'input window, operand 1, single buffered']
    #allocation6 [shape = 's32[1]{0}', space=sflag, size = 0x4, scoped, tag = 'scoped memory for _decoder_forward.1']
    #allocation7 [shape = 'u8[32768]{0}', space=vmem, size = 0x8000, scoped, tag = 'input window, operand 3, single buffered']
    #allocation8 [shape = 'u8[4096]{0}', space=vmem, size = 0x1000, scoped, tag = 'output window, operand 0, single buffered']
    %10 = vsyncpa [#allocation3], 0
    %11 = vsyncpa [#allocation6], 0
    %12 = vsyncpa [#allocation4], 0
    // Predicated region
    $region2: #{_decoder_forward.1} parent=1 // pred_check
      _
    $region3: #{_decoder_forward.1} parent=1 // pred_check_branch
      %14 = sbr.rel (0) target = $region5
    $region4: #{_decoder_forward.1} parent=1 // pred_region
      %16 = vsyncadd [#allocation3], 0
      %s18 = sshll.u32 %s0, 4
      %s19 = int_to_ptr.hbm [resolvable:$true] %s18
      %s20 = sshll.u32 [#allocation2], 4
      %s21 = int_to_ptr.vmem [resolvable:$true] %s20
      %23 = dma.hbm_to_vmem [thread:$0]  %s19, 128, %s21, [#allocation3]
    $region5: #{_decoder_forward.1} parent=1 // pred_fallthru
      _
    // Predicated region
    $region6: #{_decoder_forward.1} parent=1 // pred_check
      _
    $region7: #{_decoder_forward.1} parent=1 // pred_check_branch
      %25 = sbr.rel (0) target = $region9
    $region8: #{_decoder_forward.1} parent=1 // pred_region
      %27 = vsyncadd [#allocation6], 0
      %s28 = sshll.u32 %s1, 4
      %s29 = int_to_ptr.hbm [resolvable:$true] %s28
      %s30 = sshll.u32 [#allocation5], 4
      %s31 = int_to_ptr.vmem [resolvable:$true] %s30
      %36 = dma.hbm_to_vmem [thread:$0]  %s29, 256, %s31, [#allocation6], 64, 64, 4
    $region9: #{_decoder_forward.1} parent=1 // pred_fallthru
      _
    // Predicated region
    $region10: #{_decoder_forward.1} parent=1 // pred_check
      _
    $region11: #{_decoder_forward.1} parent=1 // pred_check_branch
      %38 = sbr.rel (0) target = $region13
    $region12: #{_decoder_forward.1} parent=1 // pred_region
      _
    $region13: #{_decoder_forward.1} parent=1 // pred_fallthru
      _
    // Predicated region
    $region14: #{_decoder_forward.1} parent=1 // pred_check
      _
    $region15: #{_decoder_forward.1} parent=1 // pred_check_branch
      %40 = sbr.rel (0) target = $region17
    $region16: #{_decoder_forward.1} parent=1 // pred_region
      %42 = vsyncadd [#allocation6], 0
      %s43 = sshll.u32 %s3, 4
      %s44 = int_to_ptr.hbm [resolvable:$true] %s43
      %s45 = sshll.u32 [#allocation7], 4
      %s46 = int_to_ptr.vmem [resolvable:$true] %s45
      %51 = dma.hbm_to_vmem [thread:$0]  %s44, 1024, %s46, [#allocation6], 64, 64, 4
    $region17: #{_decoder_forward.1} parent=1 // pred_fallthru
      _
    // Predicated region
    $region18: #{_decoder_forward.1} parent=1 // pred_check
      _
    $region19: #{_decoder_forward.1} parent=1 // pred_check_branch
      %53 = sbr.rel (0) target = $region21
    $region20: #{_decoder_forward.1} parent=1 // pred_region
      _
    $region21: #{_decoder_forward.1} parent=1 // pred_fallthru
      _
    // Predicated region
    $region22: #{_decoder_forward.1} parent=1 // pred_check
      _
    $region23: #{_decoder_forward.1} parent=1 // pred_check_branch
      %55 = sbr.rel (0) target = $region25
    $region24: #{_decoder_forward.1} parent=1 // pred_region
      %57 = dma.done [#allocation3], 128
    $region25: #{_decoder_forward.1} parent=1 // pred_fallthru
      _
    // Predicated region
    $region26: #{_decoder_forward.1} parent=1 // pred_check
      _
    $region27: #{_decoder_forward.1} parent=1 // pred_check_branch
      %59 = sbr.rel (0) target = $region29
    $region28: #{_decoder_forward.1} parent=1 // pred_region
      %61 = dma.done [#allocation6], 256
    $region29: #{_decoder_forward.1} parent=1 // pred_fallthru
      _
    // Predicated region
    $region30: #{_decoder_forward.1} parent=1 // pred_check
      _
    $region31: #{_decoder_forward.1} parent=1 // pred_check_branch
      %63 = sbr.rel (0) target = $region33
    $region32: #{_decoder_forward.1} parent=1 // pred_region
      %65 = dma.done [#allocation6], 1024
    $region33: #{_decoder_forward.1} parent=1 // pred_fallthru
      _
    %v67 = vld [vmem:[#allocation2] sm:$0xff]
    %v68 = vpack.c.bf16 %v67, %v67
    %v69 = vld [vmem:[#allocation5] sm:$0xf]
    %v70 = vld [vmem:[#allocation5 + $0x4] sm:$0xf]
    %v71 = vld [vmem:[#allocation5 + $0x8] sm:$0xf]
    %v72 = vld [vmem:[#allocation5 + $0xc] sm:$0xf]
    %v73 = vld [vmem:[%s2] sm:$0x1]
    %v75 = vperm.slane %v73, 0
    %v81 = vunpack.c.l.b16 %v69
    %v82 = vunpack.c.l.b16 %v70
    %v83 = vunpack.c.l.b16 %v71
    %v84 = vunpack.c.l.b16 %v72
    %v85 = vpack.c.b16 %v82, %v81
    %v86 = vpack.c.b16 %v84, %v83
    %vm89 = vcmask 261120
    %v91 = vsel %vm89, %v68, 0
    %93 = vmatpush.bf16.msra.mxu0 0
    %94 = vmatpush.bf16.msra.mxu0 0
    %95 = vmatpush.bf16.msra.mxu0 0
    %96 = vmatpush.bf16.msra.mxu0 0
    %97 = vmatpush.bf16.msra.mxu0 0
    %98 = vmatpush.bf16.msra.mxu0 0
    %99 = vmatpush.bf16.msra.mxu0 %v86
    %100 = vmatpush.bf16.msra.mxu0 %v85
    %101 = vmatmul.bf16.gmra.mxu0 %v91
    %v102 = vpop.f32.mrf.mxu0
    %v103 = vadd.f32 %v75, %v102
    %v104 = vpop.f32.mrf.mxu0
    %105 = vdwg.mxu0
    %v106 = vmax.f32 %v103, 0.0
    %v107 = vpack.c.bf16 %v106, %v106
    %v108 = vld [vmem:[#allocation7] sm:$0xf]
    %v109 = vld [vmem:[#allocation7 + $0x4] sm:$0xf]
    %v110 = vld [vmem:[#allocation7 + $0x8] sm:$0xf]
    %v111 = vld [vmem:[#allocation7 + $0xc] sm:$0xf]
    %v112 = vld [vmem:[#allocation7 + $0x10] sm:$0xf]
    %v113 = vld [vmem:[#allocation7 + $0x14] sm:$0xf]
    %v114 = vld [vmem:[#allocation7 + $0x18] sm:$0xf]
    %v115 = vld [vmem:[#allocation7 + $0x1c] sm:$0xf]
    %v116 = vld [vmem:[#allocation7 + $0x20] sm:$0xf]
    %v117 = vld [vmem:[#allocation7 + $0x24] sm:$0xf]
    %v118 = vld [vmem:[#allocation7 + $0x28] sm:$0xf]
    %v119 = vld [vmem:[#allocation7 + $0x2c] sm:$0xf]
    %v120 = vld [vmem:[#allocation7 + $0x30] sm:$0xf]
    %v121 = vld [vmem:[#allocation7 + $0x34] sm:$0xf]
    %v122 = vld [vmem:[#allocation7 + $0x38] sm:$0xf]
    %v123 = vld [vmem:[#allocation7 + $0x3c] sm:$0xf]
    %v124 = vld [vmem:[%s4] sm:$0x1]
    %v126 = vperm.slane %v124, 0
    %v144 = vunpack.c.l.b16 %v108
    %v145 = vunpack.c.l.b16 %v109
    %v146 = vunpack.c.l.b16 %v110
    %v147 = vunpack.c.l.b16 %v111
    %v148 = vunpack.c.l.b16 %v112
    %v149 = vunpack.c.l.b16 %v113
    %v150 = vunpack.c.l.b16 %v114
    %v151 = vunpack.c.l.b16 %v115
    %v152 = vunpack.c.l.b16 %v116
    %v153 = vunpack.c.l.b16 %v117
    %v154 = vunpack.c.l.b16 %v118
    %v155 = vunpack.c.l.b16 %v119
    %v156 = vunpack.c.l.b16 %v120
    %v157 = vunpack.c.l.b16 %v121
    %v158 = vunpack.c.l.b16 %v122
    %v159 = vunpack.c.l.b16 %v123
    %v160 = vpack.c.b16 %v145, %v144
    %v161 = vpack.c.b16 %v147, %v146
    %v162 = vpack.c.b16 %v149, %v148
    %v163 = vpack.c.b16 %v151, %v150
    %v164 = vpack.c.b16 %v153, %v152
    %v165 = vpack.c.b16 %v155, %v154
    %v166 = vpack.c.b16 %v157, %v156
    %v167 = vpack.c.b16 %v159, %v158
    %176 = vmatpush.bf16.msra.mxu0 %v167
    %177 = vmatpush.bf16.msra.mxu0 %v166
    %178 = vmatpush.bf16.msra.mxu0 %v165
    %179 = vmatpush.bf16.msra.mxu0 %v164
    %180 = vmatpush.bf16.msra.mxu0 %v163
    %181 = vmatpush.bf16.msra.mxu0 %v162
    %182 = vmatpush.bf16.msra.mxu0 %v161
    %183 = vmatpush.bf16.msra.mxu0 %v160
    %184 = vmatmul.bf16.gmra.mxu0 %v107
    %v185 = vpop.f32.mrf.mxu0
    %v186 = vadd.f32 %v126, %v185
    %v187 = vpop.f32.mrf.mxu0
    %188 = vdwg.mxu0
    %189 = vst [vmem:[#allocation8] sm:$0xff] %v186
    // Predicated region
    $region34: #{_decoder_forward.1} parent=1 // pred_check
      _
    $region35: #{_decoder_forward.1} parent=1 // pred_check_branch
      %191 = sbr.rel (0) target = $region37
    $region36: #{_decoder_forward.1} parent=1 // pred_region
      %193 = vsyncadd [#allocation4], 0
      %s195 = sshll.u32 [#allocation8], 4
      %s196 = int_to_ptr.vmem [resolvable:$true] %s195
      %s197 = sshll.u32 %s5, 4
      %s198 = int_to_ptr.hbm [resolvable:$true] %s197
      %200 = dma.vmem_to_hbm [thread:$0]  %s196, 128, %s198, [#allocation4]
    $region37: #{_decoder_forward.1} parent=1 // pred_fallthru
      _
    // Predicated region
    $region38: #{_decoder_forward.1} parent=1 // pred_check
      _
    $region39: #{_decoder_forward.1} parent=1 // pred_check_branch
      %202 = sbr.rel (0) target = $region41
    $region40: #{_decoder_forward.1} parent=1 // pred_region
      %204 = dma.done [#allocation4], 128
    $region41: #{_decoder_forward.1} parent=1 // pred_fallthru
      _
    %205 = vsyncpa [#allocation3], 1
    %206 = vsyncpa [#allocation6], 1
    %207 = vsyncpa [#allocation4], 1

</llo_original>
